<compile_context>
chip_gen: v7x
topology: tpu7x:2x2x1
jax: 0.10.0
libtpu: 0.0.40
codegen_flags: <defaults>
</compile_context>

<pallas_src>
import math

import jax
import jax.numpy as jnp
from jax.experimental import pallas as pl
from jax.experimental.pallas import tpu as pltpu


# ----------------------------- Pallas kernel -----------------------------

def _output_layer_kernel(x_ref, w_ref, b_ref, o_ref):
    """Fused (pool-folded) Linear.

    x_ref: (TM, C*64)   input rows, 8x8 window flattened channel-major (lane-dense)
    w_ref: (C*64, Kp)   fc weight with AvgPool folded in (pre-transposed, /64, K padded)
    b_ref: (1, Kp)      fc bias (K padded to Kp)
    o_ref: (TM, Kp)     logits (padded)
    """
    acc = jnp.dot(x_ref[...], w_ref[...], preferred_element_type=jnp.float32)
    o_ref[...] = (acc + b_ref[...]).astype(o_ref.dtype)


# ----------------------------- wrapper -----------------------------

def output_layer_forward(x_nchw, fc_w, fc_b, *, batch_tile=256):
    """x_nchw: (N, filters, 8, 8); fc_w: (num_classes, filters); fc_b: (num_classes,)."""
    N, C, H, W = x_nchw.shape
    # nn.Linear(filters, num_classes) after flatten requires a 1x1 pooled map,
    # i.e. an 8x8 input to AvgPool2d(8).
    assert H == 8 and W == 8, "output_layer expects an 8x8 feature map"
    K = fc_w.shape[0]
    S = H * W                     # 64 spatial positions per channel
    D = C * S                     # lane-dense contraction dim (e.g. 1024)
    Kp = max(128, pl.cdiv(K, 128) * 128)   # lane-dense output dim

    # LHS: flatten channel-major so index c*64 + s corresponds to channel c.
    x2 = x_nchw.reshape(N, D)

    # RHS: fold AvgPool2d(8) into the weight.  Each channel's column of fc_w.T
    # is repeated 64 times (channel-major, matching x2's flatten order) and
    # scaled by 1/64.  jnp.repeat (NOT tile) keeps the channel-major order.
    w2 = jnp.repeat(jnp.transpose(fc_w) * (1.0 / S), S, axis=0)      # (D, K)
    w2 = jnp.pad(w2, ((0, 0), (0, Kp - K))).astype(x_nchw.dtype)     # (D, Kp)
    b2 = jnp.pad(fc_b, (0, Kp - K)).reshape(1, Kp).astype(x_nchw.dtype)

    if N <= batch_tile:
        # Launch + DMA-latency bound regime: single no-grid launch, everything
        # whole-array resident in VMEM (a few KiB).
        out_p = pl.pallas_call(
            _output_layer_kernel,
            out_shape=jax.ShapeDtypeStruct((N, Kp), x_nchw.dtype),
            in_specs=[
                pl.BlockSpec(memory_space=pltpu.MemorySpace.VMEM),
                pl.BlockSpec(memory_space=pltpu.MemorySpace.VMEM),
                pl.BlockSpec(memory_space=pltpu.MemorySpace.VMEM),
            ],
            out_specs=pl.BlockSpec(memory_space=pltpu.MemorySpace.VMEM),
        )(x2, w2, b2)
    else:
        # Large batch: tile the batch dim (256 = v6e/v7x MXU height), keep the
        # small W2/bias whole-block, and let Mosaic pipeline/shard the batch
        # axis ("parallel" -> both v7x TensorCores).
        grid = (pl.cdiv(N, batch_tile),)
        out_p = pl.pallas_call(
            _output_layer_kernel,
            out_shape=jax.ShapeDtypeStruct((N, Kp), x_nchw.dtype),
            grid_spec=pltpu.PrefetchScalarGridSpec(
                num_scalar_prefetch=0,
                grid=grid,
                in_specs=[
                    pl.BlockSpec((batch_tile, D), lambda i: (i, 0)),
                    pl.BlockSpec((D, Kp), lambda i: (0, 0)),
                    pl.BlockSpec((1, Kp), lambda i: (0, 0)),
                ],
                out_specs=pl.BlockSpec((batch_tile, Kp), lambda i: (i, 0)),
            ),
            compiler_params=pltpu.CompilerParams(
                dimension_semantics=("parallel",)),
        )(x2, w2, b2)

    # Slice the lane-padded logits back to the true class count.
    return out_p[:, :K]


# ----------------------------- main -----------------------------

if __name__ == "__main__":
    key = jax.random.PRNGKey(0)
    kx, kw, kb, kx2 = jax.random.split(key, 4)

    batch, filters, num_classes = 2, 16, 10
    x = jax.random.normal(kx, (batch, filters, 8, 8), jnp.float32)   # NCHW input

    # PyTorch nn.Linear default init: U(-1/sqrt(fan_in), 1/sqrt(fan_in))
    bound = 1.0 / math.sqrt(filters)
    fc_w = jax.random.uniform(kw, (num_classes, filters), jnp.float32, -bound, bound)
    fc_b = jax.random.uniform(kb, (num_classes,), jnp.float32, -bound, bound)

    # Plain-JAX reference of the PyTorch forward: avg_pool(8) -> flatten -> fc.
    def ref_fn(xi):
        return jnp.mean(xi, axis=(2, 3)) @ fc_w.T + fc_b

    # --- small-batch path (no grid, all-in-VMEM) ---
    out = output_layer_forward(x, fc_w, fc_b)
    out = jax.block_until_ready(out)
    ref = ref_fn(x)
    assert out.shape == (batch, num_classes), out.shape
    assert out.dtype == jnp.float32
    assert jnp.allclose(out, ref, atol=1e-5, rtol=1e-5), float(jnp.max(jnp.abs(out - ref)))

    # --- large-batch path (batch grid, parallel axis) ---
    big_batch = 384   # 1.5 tiles of 256: exercises the grid + a partial block
    xb = jax.random.normal(kx2, (big_batch, filters, 8, 8), jnp.float32)
    outb = output_layer_forward(xb, fc_w, fc_b)
    outb = jax.block_until_ready(outb)
    refb = ref_fn(xb)
    assert outb.shape == (big_batch, num_classes), outb.shape
    assert jnp.allclose(outb, refb, atol=1e-5, rtol=1e-5), float(jnp.max(jnp.abs(outb - refb)))

    print("KERNEL_OK")
</pallas_src>

<mosaic_0001>
module attributes {stable_mosaic.version = 11 : i64} {
  func.func @_output_layer_kernel(%arg0: memref<2x1024xf32, #tpu.memory_space<vmem>>, %arg1: memref<1024x128xf32, #tpu.memory_space<vmem>>, %arg2: memref<1x128xf32, #tpu.memory_space<vmem>>, %arg3: memref<2x128xf32, #tpu.memory_space<vmem>>) attributes {dimension_semantics = [], scalar_prefetch = 0 : i64, scratch_operands = 0 : i64, tpu.core_type = #tpu.core_type<tc>} {
    %c0 = arith.constant 0 : index
    %c0_0 = arith.constant 0 : index
    %0 = vector.load %arg0[%c0, %c0_0] : memref<2x1024xf32, #tpu.memory_space<vmem>>, vector<2x1024xf32>
    %c0_1 = arith.constant 0 : index
    %c0_2 = arith.constant 0 : index
    %1 = vector.load %arg1[%c0_1, %c0_2] : memref<1024x128xf32, #tpu.memory_space<vmem>>, vector<1024x128xf32>
    %cst = arith.constant dense<0.000000e+00> : vector<2x128xf32>
    %2 = tpu.matmul %0, %1, %cst {dimension_numbers = #tpu.dot_dimension_numbers<[1], [0], [0], [1], [0, 0, 1, 1], [], []>} : vector<2x1024xf32>, vector<1024x128xf32>, vector<2x128xf32> -> vector<2x128xf32>
    %c0_3 = arith.constant 0 : index
    %c0_4 = arith.constant 0 : index
    %3 = vector.load %arg2[%c0_3, %c0_4] : memref<1x128xf32, #tpu.memory_space<vmem>>, vector<1x128xf32>
    %4 = vector.broadcast %3 : vector<1x128xf32> to vector<2x128xf32>
    %5 = arith.addf %2, %4 : vector<2x128xf32>
    %c0_5 = arith.constant 0 : index
    %c0_6 = arith.constant 0 : index
    %6 = vector.load %arg3[%c0_5, %c0_6] : memref<2x128xf32, #tpu.memory_space<vmem>>, vector<2x128xf32>
    tpu.vector_store %arg3[%c0_5, %c0_6], %5 {strides = array<i32>} : memref<2x128xf32, #tpu.memory_space<vmem>>, vector<2x128xf32>,
    return
  }
}

</mosaic_0001>

<llo_original>
// kernel: tpu_custom_call.1
$region0: #{tpu_custom_call.1}
  #allocation0 [shape = 'u32[]', space=smem, size = 0x4, offset = 0x4, fixed_abs, tag = 'smem constant byte address 0x4 - core index']
  #allocation1 [shape = 'u32[144,128]{1,0:T(1,128)}', space=vmem, size = 0x12000, scoped, tag = 'internal scratch']
  %s0 = inlined_call_operand.hbm [shape: f32[2,1024], index: 0, kind: input, shape index: {}]
  %s1 = inlined_call_operand.hbm [shape: f32[1024,128], index: 1, kind: input, shape index: {}]
  %s2 = inlined_call_operand.vmem [shape: f32[1,128], index: 2, kind: input, shape index: {}]
  %s3 = inlined_call_operand.hbm [shape: f32[2,128], index: 3, kind: output, shape index: {}]
  %s4 = sld [smem:[#allocation0]]
  $region30: #{tpu_custom_call.1} parent=0
    _
  %s6 = ssub.s32 1, %s4
  %s7 = scalar_select 0, %s6, %s4
  $region1: #{tpu_custom_call.1} parent=0
    #allocation2 [shape = 'u8[8192]{0}', space=vmem, size = 0x2000, scoped, tag = 'input window, operand 0, single buffered']
    #allocation3 [shape = 's32[1]{0}', space=sflag, size = 0x4, scoped, tag = 'scoped memory for tpu_custom_call.1']
    #allocation4 [shape = 's32[1]{0}', space=sflag, size = 0x4, scoped, tag = 'scoped memory for tpu_custom_call.1']
    #allocation5 [shape = 'u8[524288]{0}', space=vmem, size = 0x80000, scoped, tag = 'input window, operand 1, single buffered']
    #allocation6 [shape = 's32[1]{0}', space=sflag, size = 0x4, scoped, tag = 'scoped memory for tpu_custom_call.1']
    #allocation7 [shape = 'u8[1024]{0}', space=vmem, size = 0x400, scoped, tag = 'output window, operand 0, single buffered']
    %8 = vsyncpa [#allocation3], 0
    %9 = vsyncpa [#allocation6], 0
    %10 = vsyncpa [#allocation4], 0
    // Predicated region
    $region2: #{tpu_custom_call.1} parent=1 // pred_check
      _
    $region3: #{tpu_custom_call.1} parent=1 // pred_check_branch
      %12 = sbr.rel (0) target = $region5
    $region4: #{tpu_custom_call.1} parent=1 // pred_region
      %s14 = ssub.s32 256, 256
      %15 = vsyncadd [#allocation3], %s14
      %s17 = sshll.u32 [#allocation2], 4
      %s18 = int_to_ptr.vmem [resolvable:$true] %s17
      %20 = dma.hbm_to_vmem [thread:$0]  %s0, 256, %s18, [#allocation3]
    $region5: #{tpu_custom_call.1} parent=1 // pred_fallthru
      _
    // Predicated region
    $region6: #{tpu_custom_call.1} parent=1 // pred_check
      _
    $region7: #{tpu_custom_call.1} parent=1 // pred_check_branch
      %22 = sbr.rel (0) target = $region9
    $region8: #{tpu_custom_call.1} parent=1 // pred_region
      %s24 = ssub.s32 16384, 16384
      %25 = vsyncadd [#allocation6], %s24
      %s26 = sshll.u32 [#allocation5], 4
      %s27 = int_to_ptr.vmem [resolvable:$true] %s26
      %32 = dma.hbm_to_vmem [thread:$0]  %s1, 16384, %s27, [#allocation6], 128, 128, 8
    $region9: #{tpu_custom_call.1} parent=1 // pred_fallthru
      _
    // Predicated region
    $region10: #{tpu_custom_call.1} parent=1 // pred_check
      _
    $region11: #{tpu_custom_call.1} parent=1 // pred_check_branch
      %34 = sbr.rel (0) target = $region13
    $region12: #{tpu_custom_call.1} parent=1 // pred_region
      _
    $region13: #{tpu_custom_call.1} parent=1 // pred_fallthru
      _
    // Predicated region
    $region14: #{tpu_custom_call.1} parent=1 // pred_check
      _
    $region15: #{tpu_custom_call.1} parent=1 // pred_check_branch
      %36 = sbr.rel (0) target = $region17
    $region16: #{tpu_custom_call.1} parent=1 // pred_region
      %37 = dma.done [#allocation3], 256
    $region17: #{tpu_custom_call.1} parent=1 // pred_fallthru
      _
    // Predicated region
    $region18: #{tpu_custom_call.1} parent=1 // pred_check
      _
    $region19: #{tpu_custom_call.1} parent=1 // pred_check_branch
      %39 = sbr.rel (0) target = $region21
    $region20: #{tpu_custom_call.1} parent=1 // pred_region
      %40 = dma.done [#allocation6], 16384
    $region21: #{tpu_custom_call.1} parent=1 // pred_fallthru
      _
    %v41 = vld [vmem:[#allocation2] sm:$0xff]
    %v42 = vld [vmem:[#allocation2 + $0x8] sm:$0xff]
    %v43 = vld [vmem:[#allocation5] sm:$0xff]
    %v44 = vld [vmem:[#allocation5 + $0x8] sm:$0xff]
    %v45 = vld [vmem:[#allocation5 + $0x10] sm:$0xff]
    %v46 = vld [vmem:[#allocation5 + $0x18] sm:$0xff]
    %v47 = vld [vmem:[#allocation5 + $0x20] sm:$0xff]
    %v48 = vld [vmem:[#allocation5 + $0x28] sm:$0xff]
    %v49 = vld [vmem:[#allocation5 + $0x30] sm:$0xff]
    %v50 = vld [vmem:[#allocation5 + $0x38] sm:$0xff]
    %v51 = vld [vmem:[#allocation5 + $0x40] sm:$0xff]
    %v52 = vld [vmem:[#allocation5 + $0x48] sm:$0xff]
    %v53 = vld [vmem:[#allocation5 + $0x50] sm:$0xff]
    %v54 = vld [vmem:[#allocation5 + $0x58] sm:$0xff]
    %v55 = vld [vmem:[#allocation5 + $0x60] sm:$0xff]
    %v56 = vld [vmem:[#allocation5 + $0x68] sm:$0xff]
    %v57 = vld [vmem:[#allocation5 + $0x70] sm:$0xff]
    %v58 = vld [vmem:[#allocation5 + $0x78] sm:$0xff]
    %v59 = vld [vmem:[#allocation5 + $0x80] sm:$0xff]
    %v60 = vld [vmem:[#allocation5 + $0x88] sm:$0xff]
    %v61 = vld [vmem:[#allocation5 + $0x90] sm:$0xff]
    %v62 = vld [vmem:[#allocation5 + $0x98] sm:$0xff]
    %v63 = vld [vmem:[#allocation5 + $0xa0] sm:$0xff]
    %v64 = vld [vmem:[#allocation5 + $0xa8] sm:$0xff]
    %v65 = vld [vmem:[#allocation5 + $0xb0] sm:$0xff]
    %v66 = vld [vmem:[#allocation5 + $0xb8] sm:$0xff]
    %v67 = vld [vmem:[#allocation5 + $0xc0] sm:$0xff]
    %v68 = vld [vmem:[#allocation5 + $0xc8] sm:$0xff]
    %v69 = vld [vmem:[#allocation5 + $0xd0] sm:$0xff]
    %v70 = vld [vmem:[#allocation5 + $0xd8] sm:$0xff]
    %v71 = vld [vmem:[#allocation5 + $0xe0] sm:$0xff]
    %v72 = vld [vmem:[#allocation5 + $0xe8] sm:$0xff]
    %v73 = vld [vmem:[#allocation5 + $0xf0] sm:$0xff]
    %v74 = vld [vmem:[#allocation5 + $0xf8] sm:$0xff]
    %v75 = vld [vmem:[#allocation5 + $0x100] sm:$0xff]
    %v76 = vld [vmem:[#allocation5 + $0x108] sm:$0xff]
    %v77 = vld [vmem:[#allocation5 + $0x110] sm:$0xff]
    %v78 = vld [vmem:[#allocation5 + $0x118] sm:$0xff]
    %v79 = vld [vmem:[#allocation5 + $0x120] sm:$0xff]
    %v80 = vld [vmem:[#allocation5 + $0x128] sm:$0xff]
    %v81 = vld [vmem:[#allocation5 + $0x130] sm:$0xff]
    %v82 = vld [vmem:[#allocation5 + $0x138] sm:$0xff]
    %v83 = vld [vmem:[#allocation5 + $0x140] sm:$0xff]
    %v84 = vld [vmem:[#allocation5 + $0x148] sm:$0xff]
    %v85 = vld [vmem:[#allocation5 + $0x150] sm:$0xff]
    %v86 = vld [vmem:[#allocation5 + $0x158] sm:$0xff]
    %v87 = vld [vmem:[#allocation5 + $0x160] sm:$0xff]
    %v88 = vld [vmem:[#allocation5 + $0x168] sm:$0xff]
    %v89 = vld [vmem:[#allocation5 + $0x170] sm:$0xff]
    %v90 = vld [vmem:[#allocation5 + $0x178] sm:$0xff]
    %v91 = vld [vmem:[#allocation5 + $0x180] sm:$0xff]
    %v92 = vld [vmem:[#allocation5 + $0x188] sm:$0xff]
    %v93 = vld [vmem:[#allocation5 + $0x190] sm:$0xff]
    %v94 = vld [vmem:[#allocation5 + $0x198] sm:$0xff]
    %v95 = vld [vmem:[#allocation5 + $0x1a0] sm:$0xff]
    %v96 = vld [vmem:[#allocation5 + $0x1a8] sm:$0xff]
    %v97 = vld [vmem:[#allocation5 + $0x1b0] sm:$0xff]
    %v98 = vld [vmem:[#allocation5 + $0x1b8] sm:$0xff]
    %v99 = vld [vmem:[#allocation5 + $0x1c0] sm:$0xff]
    %v100 = vld [vmem:[#allocation5 + $0x1c8] sm:$0xff]
    %v101 = vld [vmem:[#allocation5 + $0x1d0] sm:$0xff]
    %v102 = vld [vmem:[#allocation5 + $0x1d8] sm:$0xff]
    %v103 = vld [vmem:[#allocation5 + $0x1e0] sm:$0xff]
    %v104 = vld [vmem:[#allocation5 + $0x1e8] sm:$0xff]
    %v105 = vld [vmem:[#allocation5 + $0x1f0] sm:$0xff]
    %v106 = vld [vmem:[#allocation5 + $0x1f8] sm:$0xff]
    %v107 = vld [vmem:[#allocation5 + $0x200] sm:$0xff]
    %v108 = vld [vmem:[#allocation5 + $0x208] sm:$0xff]
    %v109 = vld [vmem:[#allocation5 + $0x210] sm:$0xff]
    %v110 = vld [vmem:[#allocation5 + $0x218] sm:$0xff]
    %v111 = vld [vmem:[#allocation5 + $0x220] sm:$0xff]
    %v112 = vld [vmem:[#allocation5 + $0x228] sm:$0xff]
    %v113 = vld [vmem:[#allocation5 + $0x230] sm:$0xff]
    %v114 = vld [vmem:[#allocation5 + $0x238] sm:$0xff]
    %v115 = vld [vmem:[#allocation5 + $0x240] sm:$0xff]
    %v116 = vld [vmem:[#allocation5 + $0x248] sm:$0xff]
    %v117 = vld [vmem:[#allocation5 + $0x250] sm:$0xff]
    %v118 = vld [vmem:[#allocation5 + $0x258] sm:$0xff]
    %v119 = vld [vmem:[#allocation5 + $0x260] sm:$0xff]
    %v120 = vld [vmem:[#allocation5 + $0x268] sm:$0xff]
    %v121 = vld [vmem:[#allocation5 + $0x270] sm:$0xff]
    %v122 = vld [vmem:[#allocation5 + $0x278] sm:$0xff]
    %v123 = vld [vmem:[#allocation5 + $0x280] sm:$0xff]
    %v124 = vld [vmem:[#allocation5 + $0x288] sm:$0xff]
    %v125 = vld [vmem:[#allocation5 + $0x290] sm:$0xff]
    %v126 = vld [vmem:[#allocation5 + $0x298] sm:$0xff]
    %v127 = vld [vmem:[#allocation5 + $0x2a0] sm:$0xff]
    %v128 = vld [vmem:[#allocation5 + $0x2a8] sm:$0xff]
    %v129 = vld [vmem:[#allocation5 + $0x2b0] sm:$0xff]
    %v130 = vld [vmem:[#allocation5 + $0x2b8] sm:$0xff]
    %v131 = vld [vmem:[#allocation5 + $0x2c0] sm:$0xff]
    %v132 = vld [vmem:[#allocation5 + $0x2c8] sm:$0xff]
    %v133 = vld [vmem:[#allocation5 + $0x2d0] sm:$0xff]
    %v134 = vld [vmem:[#allocation5 + $0x2d8] sm:$0xff]
    %v135 = vld [vmem:[#allocation5 + $0x2e0] sm:$0xff]
    %v136 = vld [vmem:[#allocation5 + $0x2e8] sm:$0xff]
    %v137 = vld [vmem:[#allocation5 + $0x2f0] sm:$0xff]
    %v138 = vld [vmem:[#allocation5 + $0x2f8] sm:$0xff]
    %v139 = vld [vmem:[#allocation5 + $0x300] sm:$0xff]
    %v140 = vld [vmem:[#allocation5 + $0x308] sm:$0xff]
    %v141 = vld [vmem:[#allocation5 + $0x310] sm:$0xff]
    %v142 = vld [vmem:[#allocation5 + $0x318] sm:$0xff]
    %v143 = vld [vmem:[#allocation5 + $0x320] sm:$0xff]
    %v144 = vld [vmem:[#allocation5 + $0x328] sm:$0xff]
    %v145 = vld [vmem:[#allocation5 + $0x330] sm:$0xff]
    %v146 = vld [vmem:[#allocation5 + $0x338] sm:$0xff]
    %v147 = vld [vmem:[#allocation5 + $0x340] sm:$0xff]
    %v148 = vld [vmem:[#allocation5 + $0x348] sm:$0xff]
    %v149 = vld [vmem:[#allocation5 + $0x350] sm:$0xff]
    %v150 = vld [vmem:[#allocation5 + $0x358] sm:$0xff]
    %v151 = vld [vmem:[#allocation5 + $0x360] sm:$0xff]
    %v152 = vld [vmem:[#allocation5 + $0x368] sm:$0xff]
    %v153 = vld [vmem:[#allocation5 + $0x370] sm:$0xff]
    %v154 = vld [vmem:[#allocation5 + $0x378] sm:$0xff]
    %v155 = vld [vmem:[#allocation5 + $0x380] sm:$0xff]
    %v156 = vld [vmem:[#allocation5 + $0x388] sm:$0xff]
    %v157 = vld [vmem:[#allocation5 + $0x390] sm:$0xff]
    %v158 = vld [vmem:[#allocation5 + $0x398] sm:$0xff]
    %v159 = vld [vmem:[#allocation5 + $0x3a0] sm:$0xff]
    %v160 = vld [vmem:[#allocation5 + $0x3a8] sm:$0xff]
    %v161 = vld [vmem:[#allocation5 + $0x3b0] sm:$0xff]
    %v162 = vld [vmem:[#allocation5 + $0x3b8] sm:$0xff]
    %v163 = vld [vmem:[#allocation5 + $0x3c0] sm:$0xff]
    %v164 = vld [vmem:[#allocation5 + $0x3c8] sm:$0xff]
    %v165 = vld [vmem:[#allocation5 + $0x3d0] sm:$0xff]
    %v166 = vld [vmem:[#allocation5 + $0x3d8] sm:$0xff]
    %v167 = vld [vmem:[#allocation5 + $0x3e0] sm:$0xff]
    %v168 = vld [vmem:[#allocation5 + $0x3e8] sm:$0xff]
    %v169 = vld [vmem:[#allocation5 + $0x3f0] sm:$0xff]
    %v170 = vld [vmem:[#allocation5 + $0x3f8] sm:$0xff]
    %v171 = vld [vmem:[%s2] sm:$0x1]
    %v173 = vlaneseq
    %v174 = vshrl.u32 %v173, 7
    %v175 = vsub.s32 0, %v174
    %v176 = vrot.slane %v171, %v175
    %v180 = vcombine.high %v41, %v41
    %v182 = vunpack.c.l.s4 1983009808
    %v183 = vunpack.c.0.s8 %v182
    %v184 = vlaneseq
    %v185 = vshrl.u32 %v184, 7
    %v186 = vsub.s32 %v183, %v185
    %v187 = vrot.slane %v41, %v186
    %v189 = vunpack.c.l.s4 1983009808
    %v190 = vunpack.c.0.s8 %v189
    %v191 = vlaneseq
    %v192 = vshrl.u32 %v191, 7
    %v193 = vsub.s32 %v190, %v192
    %v194 = vrot.slane %v180, %v193
    %v195 = vcombine.high %v187, %v187
    %v196 = vcombine.high %v194, %v194
    %v197 = vcombine.high %v42, %v42
    %v199 = vunpack.c.l.s4 1983009808
    %v200 = vunpack.c.0.s8 %v199
    %v201 = vlaneseq
    %v202 = vshrl.u32 %v201, 7
    %v203 = vsub.s32 %v200, %v202
    %v204 = vrot.slane %v42, %v203
    %v206 = vunpack.c.l.s4 1983009808
    %v207 = vunpack.c.0.s8 %v206
    %v208 = vlaneseq
    %v209 = vshrl.u32 %v208, 7
    %v210 = vsub.s32 %v207, %v209
    %v211 = vrot.slane %v197, %v210
    %v212 = vcombine.high %v204, %v204
    %v213 = vcombine.high %v211, %v211
    %222 = vmatprep.subr.mxu0 0.0
    %223 = vmatpush1.msra.mxu0 %v43
    %224 = vmatprep.subr.mxu0 0.0
    %225 = vmatpush1.msra.mxu0 %v44
    %226 = vmatprep.subr.mxu0 0.0
    %227 = vmatpush1.msra.mxu0 %v45
    %228 = vmatprep.subr.mxu0 0.0
    %229 = vmatpush1.msra.mxu0 %v46
    %230 = vmatprep.subr.mxu0 0.0
    %231 = vmatpush1.msra.mxu0 %v47
    %232 = vmatprep.subr.mxu0 0.0
    %233 = vmatpush1.msra.mxu0 %v48
    %234 = vmatprep.subr.mxu0 0.0
    %235 = vmatpush1.msra.mxu0 %v49
    %236 = vmatprep.subr.mxu0 0.0
    %237 = vmatpush1.msra.mxu0 %v50
    %238 = vmatprep.subr.mxu0 0.0
    %239 = vmatpush1.msra.mxu0 %v51
    %240 = vmatprep.subr.mxu0 0.0
    %241 = vmatpush1.msra.mxu0 %v52
    %242 = vmatprep.subr.mxu0 0.0
    %243 = vmatpush1.msra.mxu0 %v53
    %244 = vmatprep.subr.mxu0 0.0
    %245 = vmatpush1.msra.mxu0 %v54
    %246 = vmatprep.subr.mxu0 0.0
    %247 = vmatpush1.msra.mxu0 %v55
    %248 = vmatprep.subr.mxu0 0.0
    %249 = vmatpush1.msra.mxu0 %v56
    %250 = vmatprep.subr.mxu0 0.0
    %251 = vmatpush1.msra.mxu0 %v57
    %252 = vmatprep.subr.mxu0 0.0
    %253 = vmatpush1.msra.mxu0 %v58
    %254 = vmatprep.subr.mxu0 0.0
    %255 = vmatpush1.msra.mxu0 %v59
    %256 = vmatprep.subr.mxu0 0.0
    %257 = vmatpush1.msra.mxu0 %v60
    %258 = vmatprep.subr.mxu0 0.0
    %259 = vmatpush1.msra.mxu0 %v61
    %260 = vmatprep.subr.mxu0 0.0
    %261 = vmatpush1.msra.mxu0 %v62
    %262 = vmatprep.subr.mxu0 0.0
    %263 = vmatpush1.msra.mxu0 %v63
    %264 = vmatprep.subr.mxu0 0.0
    %265 = vmatpush1.msra.mxu0 %v64
    %266 = vmatprep.subr.mxu0 0.0
    %267 = vmatpush1.msra.mxu0 %v65
    %268 = vmatprep.subr.mxu0 0.0
    %269 = vmatpush1.msra.mxu0 %v66
    %270 = vmatprep.subr.mxu0 0.0
    %271 = vmatpush1.msra.mxu0 %v67
    %272 = vmatprep.subr.mxu0 0.0
    %273 = vmatpush1.msra.mxu0 %v68
    %274 = vmatprep.subr.mxu0 0.0
    %275 = vmatpush1.msra.mxu0 %v69
    %276 = vmatprep.subr.mxu0 0.0
    %277 = vmatpush1.msra.mxu0 %v70
    %278 = vmatprep.subr.mxu0 0.0
    %279 = vmatpush1.msra.mxu0 %v71
    %280 = vmatprep.subr.mxu0 0.0
    %281 = vmatpush1.msra.mxu0 %v72
    %282 = vmatprep.subr.mxu0 0.0
    %283 = vmatpush1.msra.mxu0 %v73
    %284 = vmatprep.subr.mxu0 0.0
    %285 = vmatpush1.msra.mxu0 %v74
    %286 = vmatprep.mubr.f32.mxu0 %v195
    %287 = vmatmul.mubr.f32.gmra.mrb[0].mxu0 %v187
    %v288 = vpop.f32.mrb[0].mxu0
    %v289 = vadd.f32 %v176, %v288
    %v290 = vpop.f32.mrb[0].mxu0
    %291 = vdwg.mxu0
    %292 = vmatprep.subr.mxu0 0.0
    %293 = vmatpush1.msra.mxu0 %v75
    %294 = vmatprep.subr.mxu0 0.0
    %295 = vmatpush1.msra.mxu0 %v76
    %296 = vmatprep.subr.mxu0 0.0
    %297 = vmatpush1.msra.mxu0 %v77
    %298 = vmatprep.subr.mxu0 0.0
    %299 = vmatpush1.msra.mxu0 %v78
    %300 = vmatprep.subr.mxu0 0.0
    %301 = vmatpush1.msra.mxu0 %v79
    %302 = vmatprep.subr.mxu0 0.0
    %303 = vmatpush1.msra.mxu0 %v80
    %304 = vmatprep.subr.mxu0 0.0
    %305 = vmatpush1.msra.mxu0 %v81
    %306 = vmatprep.subr.mxu0 0.0
    %307 = vmatpush1.msra.mxu0 %v82
    %308 = vmatprep.subr.mxu0 0.0
    %309 = vmatpush1.msra.mxu0 %v83
    %310 = vmatprep.subr.mxu0 0.0
    %311 = vmatpush1.msra.mxu0 %v84
    %312 = vmatprep.subr.mxu0 0.0
    %313 = vmatpush1.msra.mxu0 %v85
    %314 = vmatprep.subr.mxu0 0.0
    %315 = vmatpush1.msra.mxu0 %v86
    %316 = vmatprep.subr.mxu0 0.0
    %317 = vmatpush1.msra.mxu0 %v87
    %318 = vmatprep.subr.mxu0 0.0
    %319 = vmatpush1.msra.mxu0 %v88
    %320 = vmatprep.subr.mxu0 0.0
    %321 = vmatpush1.msra.mxu0 %v89
    %322 = vmatprep.subr.mxu0 0.0
    %323 = vmatpush1.msra.mxu0 %v90
    %324 = vmatprep.subr.mxu0 0.0
    %325 = vmatpush1.msra.mxu0 %v91
    %326 = vmatprep.subr.mxu0 0.0
    %327 = vmatpush1.msra.mxu0 %v92
    %328 = vmatprep.subr.mxu0 0.0
    %329 = vmatpush1.msra.mxu0 %v93
    %330 = vmatprep.subr.mxu0 0.0
    %331 = vmatpush1.msra.mxu0 %v94
    %332 = vmatprep.subr.mxu0 0.0
    %333 = vmatpush1.msra.mxu0 %v95
    %334 = vmatprep.subr.mxu0 0.0
    %335 = vmatpush1.msra.mxu0 %v96
    %336 = vmatprep.subr.mxu0 0.0
    %337 = vmatpush1.msra.mxu0 %v97
    %338 = vmatprep.subr.mxu0 0.0
    %339 = vmatpush1.msra.mxu0 %v98
    %340 = vmatprep.subr.mxu0 0.0
    %341 = vmatpush1.msra.mxu0 %v99
    %342 = vmatprep.subr.mxu0 0.0
    %343 = vmatpush1.msra.mxu0 %v100
    %344 = vmatprep.subr.mxu0 0.0
    %345 = vmatpush1.msra.mxu0 %v101
    %346 = vmatprep.subr.mxu0 0.0
    %347 = vmatpush1.msra.mxu0 %v102
    %348 = vmatprep.subr.mxu0 0.0
    %349 = vmatpush1.msra.mxu0 %v103
    %350 = vmatprep.subr.mxu0 0.0
    %351 = vmatpush1.msra.mxu0 %v104
    %352 = vmatprep.subr.mxu0 0.0
    %353 = vmatpush1.msra.mxu0 %v105
    %354 = vmatprep.subr.mxu0 0.0
    %355 = vmatpush1.msra.mxu0 %v106
    %356 = vmatprep.mubr.f32.mxu0 %v196
    %357 = vmatmul.mubr.f32.gmra.mrb[0].mxu0 %v194
    %v358 = vpop.f32.mrb[0].mxu0
    %v359 = vadd.f32 %v289, %v358
    %v360 = vpop.f32.mrb[0].mxu0
    %361 = vdwg.mxu0
    %362 = vmatprep.subr.mxu0 0.0
    %363 = vmatpush1.msra.mxu0 %v107
    %364 = vmatprep.subr.mxu0 0.0
    %365 = vmatpush1.msra.mxu0 %v108
    %366 = vmatprep.subr.mxu0 0.0
    %367 = vmatpush1.msra.mxu0 %v109
    %368 = vmatprep.subr.mxu0 0.0
    %369 = vmatpush1.msra.mxu0 %v110
    %370 = vmatprep.subr.mxu0 0.0
    %371 = vmatpush1.msra.mxu0 %v111
    %372 = vmatprep.subr.mxu0 0.0
    %373 = vmatpush1.msra.mxu0 %v112
    %374 = vmatprep.subr.mxu0 0.0
    %375 = vmatpush1.msra.mxu0 %v113
    %376 = vmatprep.subr.mxu0 0.0
    %377 = vmatpush1.msra.mxu0 %v114
    %378 = vmatprep.subr.mxu0 0.0
    %379 = vmatpush1.msra.mxu0 %v115
    %380 = vmatprep.subr.mxu0 0.0
    %381 = vmatpush1.msra.mxu0 %v116
    %382 = vmatprep.subr.mxu0 0.0
    %383 = vmatpush1.msra.mxu0 %v117
    %384 = vmatprep.subr.mxu0 0.0
    %385 = vmatpush1.msra.mxu0 %v118
    %386 = vmatprep.subr.mxu0 0.0
    %387 = vmatpush1.msra.mxu0 %v119
    %388 = vmatprep.subr.mxu0 0.0
    %389 = vmatpush1.msra.mxu0 %v120
    %390 = vmatprep.subr.mxu0 0.0
    %391 = vmatpush1.msra.mxu0 %v121
    %392 = vmatprep.subr.mxu0 0.0
    %393 = vmatpush1.msra.mxu0 %v122
    %394 = vmatprep.subr.mxu0 0.0
    %395 = vmatpush1.msra.mxu0 %v123
    %396 = vmatprep.subr.mxu0 0.0
    %397 = vmatpush1.msra.mxu0 %v124
    %398 = vmatprep.subr.mxu0 0.0
    %399 = vmatpush1.msra.mxu0 %v125
    %400 = vmatprep.subr.mxu0 0.0
    %401 = vmatpush1.msra.mxu0 %v126
    %402 = vmatprep.subr.mxu0 0.0
    %403 = vmatpush1.msra.mxu0 %v127
    %404 = vmatprep.subr.mxu0 0.0
    %405 = vmatpush1.msra.mxu0 %v128
    %406 = vmatprep.subr.mxu0 0.0
    %407 = vmatpush1.msra.mxu0 %v129
    %408 = vmatprep.subr.mxu0 0.0
    %409 = vmatpush1.msra.mxu0 %v130
    %410 = vmatprep.subr.mxu0 0.0
    %411 = vmatpush1.msra.mxu0 %v131
    %412 = vmatprep.subr.mxu0 0.0
    %413 = vmatpush1.msra.mxu0 %v132
    %414 = vmatprep.subr.mxu0 0.0
    %415 = vmatpush1.msra.mxu0 %v133
    %416 = vmatprep.subr.mxu0 0.0
    %417 = vmatpush1.msra.mxu0 %v134
    %418 = vmatprep.subr.mxu0 0.0
    %419 = vmatpush1.msra.mxu0 %v135
    %420 = vmatprep.subr.mxu0 0.0
    %421 = vmatpush1.msra.mxu0 %v136
    %422 = vmatprep.subr.mxu0 0.0
    %423 = vmatpush1.msra.mxu0 %v137
    %424 = vmatprep.subr.mxu0 0.0
    %425 = vmatpush1.msra.mxu0 %v138
    %426 = vmatprep.mubr.f32.mxu0 %v212
    %427 = vmatmul.mubr.f32.gmra.mrb[0].mxu0 %v204
    %v428 = vpop.f32.mrb[0].mxu0
    %v429 = vadd.f32 %v359, %v428
    %v430 = vpop.f32.mrb[0].mxu0
    %431 = vdwg.mxu0
    %432 = vmatprep.subr.mxu0 0.0
    %433 = vmatpush1.msra.mxu0 %v139
    %434 = vmatprep.subr.mxu0 0.0
    %435 = vmatpush1.msra.mxu0 %v140
    %436 = vmatprep.subr.mxu0 0.0
    %437 = vmatpush1.msra.mxu0 %v141
    %438 = vmatprep.subr.mxu0 0.0
    %439 = vmatpush1.msra.mxu0 %v142
    %440 = vmatprep.subr.mxu0 0.0
    %441 = vmatpush1.msra.mxu0 %v143
    %442 = vmatprep.subr.mxu0 0.0
    %443 = vmatpush1.msra.mxu0 %v144
    %444 = vmatprep.subr.mxu0 0.0
    %445 = vmatpush1.msra.mxu0 %v145
    %446 = vmatprep.subr.mxu0 0.0
    %447 = vmatpush1.msra.mxu0 %v146
    %448 = vmatprep.subr.mxu0 0.0
    %449 = vmatpush1.msra.mxu0 %v147
    %450 = vmatprep.subr.mxu0 0.0
    %451 = vmatpush1.msra.mxu0 %v148
    %452 = vmatprep.subr.mxu0 0.0
    %453 = vmatpush1.msra.mxu0 %v149
    %454 = vmatprep.subr.mxu0 0.0
    %455 = vmatpush1.msra.mxu0 %v150
    %456 = vmatprep.subr.mxu0 0.0
    %457 = vmatpush1.msra.mxu0 %v151
    %458 = vmatprep.subr.mxu0 0.0
    %459 = vmatpush1.msra.mxu0 %v152
    %460 = vmatprep.subr.mxu0 0.0
    %461 = vmatpush1.msra.mxu0 %v153
    %462 = vmatprep.subr.mxu0 0.0
    %463 = vmatpush1.msra.mxu0 %v154
    %464 = vmatprep.subr.mxu0 0.0
    %465 = vmatpush1.msra.mxu0 %v155
    %466 = vmatprep.subr.mxu0 0.0
    %467 = vmatpush1.msra.mxu0 %v156
    %468 = vmatprep.subr.mxu0 0.0
    %469 = vmatpush1.msra.mxu0 %v157
    %470 = vmatprep.subr.mxu0 0.0
    %471 = vmatpush1.msra.mxu0 %v158
    %472 = vmatprep.subr.mxu0 0.0
    %473 = vmatpush1.msra.mxu0 %v159
    %474 = vmatprep.subr.mxu0 0.0
    %475 = vmatpush1.msra.mxu0 %v160
    %476 = vmatprep.subr.mxu0 0.0
    %477 = vmatpush1.msra.mxu0 %v161
    %478 = vmatprep.subr.mxu0 0.0
    %479 = vmatpush1.msra.mxu0 %v162
    %480 = vmatprep.subr.mxu0 0.0
    %481 = vmatpush1.msra.mxu0 %v163
    %482 = vmatprep.subr.mxu0 0.0
    %483 = vmatpush1.msra.mxu0 %v164
    %484 = vmatprep.subr.mxu0 0.0
    %485 = vmatpush1.msra.mxu0 %v165
    %486 = vmatprep.subr.mxu0 0.0
    %487 = vmatpush1.msra.mxu0 %v166
    %488 = vmatprep.subr.mxu0 0.0
    %489 = vmatpush1.msra.mxu0 %v167
    %490 = vmatprep.subr.mxu0 0.0
    %491 = vmatpush1.msra.mxu0 %v168
    %492 = vmatprep.subr.mxu0 0.0
    %493 = vmatpush1.msra.mxu0 %v169
    %494 = vmatprep.subr.mxu0 0.0
    %495 = vmatpush1.msra.mxu0 %v170
    %496 = vmatprep.mubr.f32.mxu0 %v213
    %497 = vmatmul.mubr.f32.gmra.mrb[0].mxu0 %v211
    %v498 = vpop.f32.mrb[0].mxu0
    %v499 = vadd.f32 %v429, %v498
    %v500 = vpop.f32.mrb[0].mxu0
    %501 = vdwg.mxu0
    %502 = vst [vmem:[#allocation7] sm:$0x3] %v499
    // Predicated region
    $region22: #{tpu_custom_call.1} parent=1 // pred_check
      _
    $region23: #{tpu_custom_call.1} parent=1 // pred_check_branch
      %504 = sbr.rel (0) target = $region25
    $region24: #{tpu_custom_call.1} parent=1 // pred_region
      %s506 = ssub.s32 32, 32
      %507 = vsyncadd [#allocation4], %s506
      %s509 = sshll.u32 [#allocation7], 4
      %s510 = int_to_ptr.vmem [resolvable:$true] %s509
      %512 = dma.vmem_to_hbm [thread:$0]  %s510, 32, %s3, [#allocation4]
    $region25: #{tpu_custom_call.1} parent=1 // pred_fallthru
      _
    // Predicated region
    $region26: #{tpu_custom_call.1} parent=1 // pred_check
      _
    $region27: #{tpu_custom_call.1} parent=1 // pred_check_branch
      %514 = sbr.rel (0) target = $region29
    $region28: #{tpu_custom_call.1} parent=1 // pred_region
      %515 = dma.done [#allocation4], 32
    $region29: #{tpu_custom_call.1} parent=1 // pred_fallthru
      _
    %516 = vsyncpa [#allocation3], 1
    %517 = vsyncpa [#allocation6], 1
    %518 = vsyncpa [#allocation4], 1

</llo_original>
